<compile_context>
chip_gen: v7x
topology: tpu7x:2x2x1
jax: 0.10.0
libtpu: 0.0.40
codegen_flags: <defaults>
</compile_context>

<pallas_src>
import functools

import jax
import jax.numpy as jnp
from jax.experimental import pallas as pl
from jax.experimental.pallas import tpu as pltpu


_LANE = 128
_MAX_TS = 4096   # spatial columns per block (256 rows * 4096 cols * 4 B = 4 MiB/buffer)
_MAX_TM = 256    # rows per block (multiple of 8)


def _global_pool_kernel(x_ref, o_ref, acc_ref, *, reduction, S, TS):
    k = pl.program_id(1)
    nk = pl.num_programs(1)
    is_mean = reduction == "mean"
    pad = 0.0 if is_mean else -jnp.inf
    need_mask = (S % TS) != 0   # only the ragged last spatial tile needs masking

    @pl.when(k == 0)
    def _init():
        if is_mean:
            acc_ref[...] = jnp.zeros_like(acc_ref)
        else:
            acc_ref[...] = jnp.full_like(acc_ref, -jnp.inf)

    def load(c0, width):
        # Per-slice load + f32 cast: never materializes a full-tile f32 copy.
        sl = x_ref[:, c0:c0 + width].astype(jnp.float32)
        if need_mask:
            col = jax.lax.broadcasted_iota(jnp.int32, sl.shape, 1) + (k * TS + c0)
            sl = jnp.where(col < S, sl, pad)
        return sl

    # Stage 1: fold lane-aligned 128-wide slices on the VPU (cheap, plenty of slack).
    if TS % _LANE == 0 and TS > _LANE:
        part = load(0, _LANE)
        for c in range(1, TS // _LANE):
            sl = load(c * _LANE, _LANE)
            if is_mean:
                part = part + sl
            else:
                part = jnp.maximum(part, sl)
    else:
        part = load(0, TS)

    # Stage 2: one cross-lane (XLU) reduce of the remaining (TM, <=128) partial.
    if is_mean:
        acc_ref[...] += jnp.sum(part, axis=-1, keepdims=True)
    else:
        acc_ref[...] = jnp.maximum(acc_ref[...],
                                   jnp.max(part, axis=-1, keepdims=True))

    @pl.when(k == nk - 1)
    def _finalize():
        if is_mean:
            o_ref[...] = (acc_ref[...] * (1.0 / S)).astype(o_ref.dtype)
        else:
            o_ref[...] = acc_ref[...].astype(o_ref.dtype)


def _pick_row_tile(rows):
    if rows <= _MAX_TM:
        return rows          # full extent along rows: always layout-legal
    return _MAX_TM           # multiple of 8; ragged last row tile rows are discarded


def _pick_spatial_tile(S):
    if S <= _MAX_TS:
        return S             # full extent along spatial: always layout-legal
    return _MAX_TS           # multiple of 128; ragged last tile masked in the kernel


def global_pool(x, reduction: str = "mean", keepdim: bool = True, dim="spatial"):
    """Global pooling over the spatial dims of a (B, C, *spatial) tensor."""
    reduction = reduction.lower()
    if reduction not in ("mean", "max"):
        raise ValueError(f'Unknown reduction "{reduction}"')
    if not (isinstance(dim, str) and dim[:1].lower() == "s"):
        # TODO(synk): integer `dim` variants (pool over arbitrary axes) not implemented;
        # only dim='spatial' (the module default) is supported by this kernel.
        raise NotImplementedError("only dim='spatial' is implemented")

    B, C = x.shape[0], x.shape[1]
    spatial = x.shape[2:]
    S = 1
    for s in spatial:
        S *= int(s)
    BC = B * C

    x2d = x.reshape(BC, S)   # rows = (batch, channel), cols = flattened spatial
    TM = _pick_row_tile(BC)
    TS = _pick_spatial_tile(S)

    kernel = functools.partial(_global_pool_kernel, reduction=reduction, S=S, TS=TS)

    out2d = pl.pallas_call(
        kernel,
        out_shape=jax.ShapeDtypeStruct((BC, 1), x.dtype),
        grid_spec=pltpu.PrefetchScalarGridSpec(
            num_scalar_prefetch=0,
            grid=(pl.cdiv(BC, TM), pl.cdiv(S, TS)),   # reduction (spatial) axis last
            in_specs=[pl.BlockSpec((TM, TS), lambda i, k: (i, k))],
            out_specs=pl.BlockSpec((TM, 1), lambda i, k: (i, 0)),
            scratch_shapes=[pltpu.VMEM((TM, 1), jnp.float32)],
        ),
        compiler_params=pltpu.CompilerParams(
            dimension_semantics=("parallel", "arbitrary"),
            vmem_limit_bytes=32 << 20,
        ),
    )(x2d)

    if keepdim:
        return out2d.reshape((B, C) + (1,) * len(spatial))
    return out2d.reshape(B, C)


if __name__ == "__main__":
    key = jax.random.PRNGKey(0)

    # Default module config: reduction='mean', keepdim=True, dim='spatial'
    B, C, H, W = 2, 4, 16, 16
    x = jax.random.normal(key, (B, C, H, W), dtype=jnp.float32)

    out = jax.block_until_ready(global_pool(x, reduction="mean", keepdim=True))
    ref = jnp.mean(x, axis=(2, 3), keepdims=True)
    assert out.shape == (B, C, 1, 1), out.shape
    assert jnp.allclose(out, ref, atol=1e-5, rtol=1e-5)

    # 'max' reduction and keepdim=False
    out_max = jax.block_until_ready(global_pool(x, reduction="max", keepdim=False))
    ref_max = jnp.max(x, axis=(2, 3))
    assert out_max.shape == (B, C)
    assert jnp.allclose(out_max, ref_max)

    # Ragged shapes (spatial not a multiple of 128, rows not a multiple of 8):
    # exercises the full-extent block path.
    x2 = jax.random.normal(jax.random.PRNGKey(1), (2, 3, 7, 9), dtype=jnp.float32)
    assert jnp.allclose(global_pool(x2, "mean", True),
                        jnp.mean(x2, axis=(2, 3), keepdims=True), atol=1e-5, rtol=1e-5)
    assert jnp.allclose(global_pool(x2, "max", True),
                        jnp.max(x2, axis=(2, 3), keepdims=True))

    # S > 4096: exercises the multi-tile spatial grid, the VMEM accumulator
    # (init/accumulate/finalize) and the ragged-last-tile mask.
    x3 = jax.random.normal(jax.random.PRNGKey(2), (1, 8, 72, 72), dtype=jnp.float32)
    assert jnp.allclose(global_pool(x3, "mean", True),
                        jnp.mean(x3, axis=(2, 3), keepdims=True), atol=1e-5, rtol=1e-5)
    assert jnp.allclose(global_pool(x3, "max", True),
                        jnp.max(x3, axis=(2, 3), keepdims=True))

    # bf16 input: exercises the per-slice f32-cast path (f32 accumulation in-kernel).
    xb = jax.random.normal(jax.random.PRNGKey(3), (2, 4, 32, 32), dtype=jnp.bfloat16)
    ref_mean_b = jnp.mean(xb.astype(jnp.float32), axis=(2, 3),
                          keepdims=True).astype(jnp.bfloat16)
    assert jnp.allclose(global_pool(xb, "mean", True).astype(jnp.float32),
                        ref_mean_b.astype(jnp.float32), atol=1e-2, rtol=1e-2)
    assert jnp.allclose(global_pool(xb, "max", True),
                        jnp.max(xb, axis=(2, 3), keepdims=True))

    print("KERNEL_OK")
</pallas_src>

<mosaic_0001>
module attributes {stable_mosaic.version = 11 : i64} {
  func.func @_global_pool_kernel(%arg0: i32, %arg1: i32, %arg2: memref<8x256xf32, #tpu.memory_space<vmem>>, %arg3: memref<8x1xf32, #tpu.memory_space<vmem>>, %arg4: memref<8x1xf32, #tpu.memory_space<vmem>>) attributes {dimension_semantics = [#tpu.dimension_semantics<parallel>, #tpu.dimension_semantics<arbitrary>], iteration_bounds = array<i64: 1, 1>, scalar_prefetch = 0 : i64, scratch_operands = 1 : i64, tpu.core_type = #tpu.core_type<tc>, window_params = [{transform_indices = @transform_0, window_bounds = array<i64: 8, 256>}, {transform_indices = @transform_1, window_bounds = array<i64: 8, 1>}]} {
    %c0_i32 = arith.constant 0 : i32
    %0 = arith.cmpi eq, %arg1, %c0_i32 : i32
    %1 = arith.extui %0 : i1 to i32
    %c0_i32_0 = arith.constant 0 : i32
    %2 = arith.cmpi ne, %1, %c0_i32_0 : i32
    scf.if %2 {
      %cst_9 = arith.constant 0.000000e+00 : f32
      %14 = vector.broadcast %cst_9 : f32 to vector<8x1xf32>
      %c0_10 = arith.constant 0 : index
      %c0_11 = arith.constant 0 : index
      %15 = vector.load %arg4[%c0_10, %c0_11] : memref<8x1xf32, #tpu.memory_space<vmem>>, vector<8x1xf32>
      tpu.vector_store %arg4[%c0_10, %c0_11], %14 {strides = array<i32>} : memref<8x1xf32, #tpu.memory_space<vmem>>, vector<8x1xf32>,
    } else {
    }
    %c0 = arith.constant 0 : index
    %c0_1 = arith.constant 0 : index
    %3 = vector.load %arg2[%c0, %c0_1] : memref<8x256xf32, #tpu.memory_space<vmem>>, vector<8x128xf32>
    %c0_2 = arith.constant 0 : index
    %c128 = arith.constant 128 : index
    %4 = vector.load %arg2[%c0_2, %c128] : memref<8x256xf32, #tpu.memory_space<vmem>>, vector<8x128xf32>
    %5 = arith.addf %3, %4 : vector<8x128xf32>
    %c0_3 = arith.constant 0 : index
    %c0_4 = arith.constant 0 : index
    %6 = vector.load %arg4[%c0_3, %c0_4] : memref<8x1xf32, #tpu.memory_space<vmem>>, vector<8x1xf32>
    %cst = arith.constant dense<0.000000e+00> : vector<8xf32>
    %7 = vector.multi_reduction <add>, %5, %cst [1] : vector<8x128xf32> to vector<8xf32>
    %8 = vector.shape_cast %7 : vector<8xf32> to vector<8x1xf32>
    %9 = arith.addf %6, %8 : vector<8x1xf32>
    %c0_5 = arith.constant 0 : index
    %c0_6 = arith.constant 0 : index
    %10 = vector.load %arg4[%c0_5, %c0_6] : memref<8x1xf32, #tpu.memory_space<vmem>>, vector<8x1xf32>
    tpu.vector_store %arg4[%c0_5, %c0_6], %9 {strides = array<i32>} : memref<8x1xf32, #tpu.memory_space<vmem>>, vector<8x1xf32>,
    %c0_i32_7 = arith.constant 0 : i32
    %11 = arith.cmpi eq, %arg1, %c0_i32_7 : i32
    %12 = arith.extui %11 : i1 to i32
    %c0_i32_8 = arith.constant 0 : i32
    %13 = arith.cmpi ne, %12, %c0_i32_8 : i32
    scf.if %13 {
      %c0_9 = arith.constant 0 : index
      %c0_10 = arith.constant 0 : index
      %14 = vector.load %arg4[%c0_9, %c0_10] : memref<8x1xf32, #tpu.memory_space<vmem>>, vector<8x1xf32>
      %cst_11 = arith.constant 3.906250e-03 : f32
      %15 = vector.broadcast %cst_11 : f32 to vector<8x1xf32>
      %16 = arith.mulf %14, %15 : vector<8x1xf32>
      %c0_12 = arith.constant 0 : index
      %c0_13 = arith.constant 0 : index
      %17 = vector.load %arg3[%c0_12, %c0_13] : memref<8x1xf32, #tpu.memory_space<vmem>>, vector<8x1xf32>
      tpu.vector_store %arg3[%c0_12, %c0_13], %16 {strides = array<i32>} : memref<8x1xf32, #tpu.memory_space<vmem>>, vector<8x1xf32>,
    } else {
    }
    return
  }
  func.func @transform_0(%arg0: i32, %arg1: i32) -> (i32, i32) {
    %c0_i32 = arith.constant 0 : i32
    return %arg0, %arg1 : i32, i32
  }
  func.func @transform_1(%arg0: i32, %arg1: i32) -> (i32, i32) {
    %c0_i32 = arith.constant 0 : i32
    %c0_i32_0 = arith.constant 0 : i32
    return %arg0, %c0_i32 : i32, i32
  }
}

</mosaic_0001>

<llo_original>
// kernel: tpu_custom_call.1
$region0: #{tpu_custom_call.1}
  #allocation0 [shape = 'u32[]', space=smem, size = 0x4, offset = 0x4, fixed_abs, tag = 'smem constant byte address 0x4 - core index']
  #allocation1 [shape = 'u32[144,128]{1,0:T(1,128)}', space=vmem, size = 0x12000, scoped, tag = 'internal scratch']
  #allocation2 [shape = 'f32[8,1]{1,0:T(8,128)}', space=vmem, size = 0x1000, scoped, tag = 'scratch operand']
  %s0 = inlined_call_operand.hbm [shape: f32[8,256], index: 0, kind: input, shape index: {}]
  %s1 = inlined_call_operand.vmem [shape: f32[8,1], index: 1, kind: output, shape index: {}]
  %s2 = sld [smem:[#allocation0]]
  $region26: #{tpu_custom_call.1} parent=0
    _
  %s4 = ssub.s32 1, %s2
  %s5 = scalar_select 0, %s4, %s2
  $region1: #{tpu_custom_call.1} parent=0
    #allocation3 [shape = 'u8[8192]{0}', space=vmem, size = 0x2000, scoped, tag = 'input window, operand 0, single buffered']
    #allocation4 [shape = 's32[1]{0}', space=sflag, size = 0x4, scoped, tag = 'scoped memory for tpu_custom_call.1']
    %6 = vsyncpa [#allocation4], 0
    // Predicated region
    $region2: #{tpu_custom_call.1} parent=1 // pred_check
      _
    $region3: #{tpu_custom_call.1} parent=1 // pred_check_branch
      %8 = sbr.rel (0) target = $region5
    $region4: #{tpu_custom_call.1} parent=1 // pred_region
      %s10 = ssub.s32 256, 256
      %11 = vsyncadd [#allocation4], %s10
      %s13 = sshll.u32 [#allocation3], 4
      %s14 = int_to_ptr.vmem [resolvable:$true] %s13
      %16 = dma.hbm_to_vmem [thread:$0]  %s0, 256, %s14, [#allocation4]
    $region5: #{tpu_custom_call.1} parent=1 // pred_fallthru
      _
    // Predicated region
    $region6: #{tpu_custom_call.1} parent=1 // pred_check
      _
    $region7: #{tpu_custom_call.1} parent=1 // pred_check_branch
      %18 = sbr.rel (0) target = $region9
    $region8: #{tpu_custom_call.1} parent=1 // pred_region
      %19 = dma.done [#allocation4], 256
    $region9: #{tpu_custom_call.1} parent=1 // pred_fallthru
      _
    %p20 = scmp.eq.s32.totalorder 0, 0
    // Predicated region
    $region10: #{tpu_custom_call.1} parent=1 // pred_check
      %p21 = pneg %p20
    $region11: #{tpu_custom_call.1} parent=1 // pred_check_branch
      %23 = sbr.rel (%p21) target = $region13
    $region12: #{tpu_custom_call.1} parent=1 // pred_region
      %vm24 = vcmask 7168
      %25 = vst.msk [vmem:[#allocation2] sm:$0xff] %vm24, 0.0
    $region13: #{tpu_custom_call.1} parent=1 // pred_fallthru
      _
    %v26 = vld [vmem:[#allocation3] sm:$0xff]
    %v27 = vld [vmem:[#allocation3 + $0x8] sm:$0xff]
    %v28 = vadd.f32 %v26, %v27
    %v29 = vld [vmem:[#allocation2] sm:$0xff]
    %30 = vadd.xlane.f32.xlu0 %v28
    %v31 = vpop.xlane.xlu0 %30
    %v32 = vadd.f32 %v29, %v31
    %vm33 = vcmask 7168
    %34 = vst.msk [vmem:[#allocation2] sm:$0xff] %vm33, %v32
    // Predicated region
    $region14: #{tpu_custom_call.1} parent=1 // pred_check
      %p35 = pneg %p20
    $region15: #{tpu_custom_call.1} parent=1 // pred_check_branch
      %37 = sbr.rel (%p35) target = $region17
    $region16: #{tpu_custom_call.1} parent=1 // pred_region
      %v38 = vld [vmem:[#allocation2] sm:$0xff]
      %v39 = vmul.f32 %v38, 0.00390625
      %40 = vst.msk [vmem:[%s1] sm:$0xff] %vm33, %v39
    $region17: #{tpu_custom_call.1} parent=1 // pred_fallthru
      _
    // Predicated region
    $region18: #{tpu_custom_call.1} parent=1 // pred_check
      _
    $region19: #{tpu_custom_call.1} parent=1 // pred_check_branch
      %42 = sbr.rel (0) target = $region21
    $region20: #{tpu_custom_call.1} parent=1 // pred_region
      _
    $region21: #{tpu_custom_call.1} parent=1 // pred_fallthru
      _
    // Predicated region
    $region22: #{tpu_custom_call.1} parent=1 // pred_check
      _
    $region23: #{tpu_custom_call.1} parent=1 // pred_check_branch
      %44 = sbr.rel (0) target = $region25
    $region24: #{tpu_custom_call.1} parent=1 // pred_region
      _
    $region25: #{tpu_custom_call.1} parent=1 // pred_fallthru
      _
    %45 = vsyncpa [#allocation4], 1

</llo_original>
